<compile_context>
chip_gen: v5e
topology: v5e:2x2
jax: 0.10.0
libtpu: 0.0.40
codegen_flags: <defaults>
</compile_context>

<pallas_src>
import jax
import jax.numpy as jnp
from jax.experimental import pallas as pl
from jax.experimental.pallas import tpu as pltpu


_MAX_TILE_HW = 64 * 128  # cap the unrolled per-tile VPU loop at 64 lane-chunks


def _make_kernel(b_blk, hw, tile_hw, inv_hw):
    """Builds the kernel body with all static tiling config baked in."""
    nk = -(-hw // tile_hw)                 # grid steps along HW
    rem = hw - (nk - 1) * tile_hw          # valid elements in the last tile
    n_chunks_full = tile_hw // 128         # 128-lane chunks in a full tile
    n_full_last = rem // 128               # full chunks in the last tile
    rem_c = rem % 128                      # ragged tail lanes in the last tile

    def kernel(x_ref, w1_ref, w2_ref, o_ref, sum_acc, max_acc):
        # x_ref : (b_blk, C, tile_hw)  activations, native dtype
        # w1_ref: (C, Cr)              conv #1 weights, pre-transposed
        # w2_ref: (Cr, C)              conv #2 weights, pre-transposed
        # o_ref : (1, b_blk, C)        sigmoid(channel attention)
        # sum_acc, max_acc: (b_blk, C, 128) f32 lane-wide partial accumulators
        k = pl.program_id(1)

        @pl.when(k == 0)
        def _init():
            sum_acc[...] = jnp.zeros(sum_acc.shape, sum_acc.dtype)
            max_acc[...] = jnp.full(max_acc.shape, -jnp.inf, max_acc.dtype)

        def accum_chunks(n_chunks, tail_width):
            # Hot path: 2 VPU ops per incoming 128-lane chunk, no XLU work.
            for j in range(n_chunks):
                chunk = x_ref[:, :, pl.ds(j * 128, 128)].astype(jnp.float32)
                sum_acc[...] += chunk
                max_acc[...] = jnp.maximum(max_acc[...], chunk)
            if tail_width:
                # Ragged tail (< 128 lanes): reduce once, fold into lane 0.
                tail = x_ref[:, :, pl.ds(n_chunks * 128, tail_width)]
                tail = tail.astype(jnp.float32)
                sum_acc[:, :, pl.ds(0, 1)] += jnp.sum(
                    tail, axis=-1, keepdims=True)
                max_acc[:, :, pl.ds(0, 1)] = jnp.maximum(
                    max_acc[:, :, pl.ds(0, 1)],
                    jnp.max(tail, axis=-1, keepdims=True))

        if nk == 1:
            # Single HW tile (tile_hw == hw): chunk it, handle any tail.
            accum_chunks(n_full_last, rem_c)
        elif rem == tile_hw:
            # tile_hw divides hw: every tile is full, no masking anywhere.
            accum_chunks(n_chunks_full, 0)
        else:
            @pl.when(k < nk - 1)
            def _hot():
                accum_chunks(n_chunks_full, 0)

            @pl.when(k == nk - 1)
            def _last():
                accum_chunks(n_full_last, rem_c)

        @pl.when(k == nk - 1)
        def _finalize():
            # Single cross-lane reduce of the lane-wide partials (XLU, once).
            avg = jnp.sum(sum_acc[...], axis=-1) * inv_hw     # (b_blk, C) f32
            mx = jnp.max(max_acc[...], axis=-1)               # (b_blk, C) f32

            # Fuse the two shared-MLP branches: one pair of matmuls on (2B, C).
            pooled = jnp.concatenate([avg, mx], axis=0)        # (2*b_blk, C)
            w1 = w1_ref[...].astype(jnp.float32)               # (C, Cr)
            w2 = w2_ref[...].astype(jnp.float32)               # (Cr, C)
            h = jnp.dot(pooled, w1, preferred_element_type=jnp.float32)
            h = jnp.maximum(h, 0.0)                            # ReLU
            y = jnp.dot(h, w2, preferred_element_type=jnp.float32)

            out = jax.nn.sigmoid(y[:b_blk] + y[b_blk:])        # (b_blk, C)
            o_ref[...] = out[None].astype(o_ref.dtype)

    return kernel


def _tpu_budgets():
    """(x-block byte budget, vmem_limit_bytes), generation aware."""
    try:
        vmem = pltpu.get_tpu_info().vmem_capacity_bytes
    except Exception:
        vmem = None
    if vmem is not None and vmem > 96 * 1024 * 1024:
        # v5e / v6e: 128 MiB physical VMEM -> larger tiles amortize per-step overhead.
        return 12 * 1024 * 1024, 64 * 1024 * 1024
    # v7x-class (64 MiB / TensorCore) or unknown: stay conservative.
    return 8 * 1024 * 1024, 40 * 1024 * 1024


def _choose_tile_hw(b_blk, c, hw, itemsize, budget_bytes):
    """Pick the HW tile: full extent if it fits, else a 128-multiple under budget."""
    row_bytes = b_blk * c * itemsize
    if hw <= _MAX_TILE_HW and hw * row_bytes <= budget_bytes:
        return hw
    max_t = min(_MAX_TILE_HW,
                (budget_bytes // row_bytes) // 128 * 128,
                (hw // 128) * 128)
    max_t = max(max_t, 128)
    floor = max(128, min(512, (hw // 128) * 128))
    # Prefer a 128-multiple divisor of hw so the last tile is not ragged.
    t = max_t
    while t >= floor:
        if hw % t == 0:
            return t
        t -= 128
    return max_t


def _choose_b_blk_and_tile(B, C, HW, itemsize, budget_bytes):
    """b_blk is a divisor of B, preferring >= 2 blocks on the parallel axis
    (megacore) and >= 512-lane DMA rows (shrink b_blk before tile_hw)."""
    cap = max(1, min(8, B // 2)) if B >= 2 else 1
    divisors = [d for d in range(cap, 0, -1) if B % d == 0]
    floor = min(512, HW)
    for d in divisors:
        t = _choose_tile_hw(d, C, HW, itemsize, budget_bytes)
        if t >= floor or d == 1:
            return d, t
    return 1, _choose_tile_hw(1, C, HW, itemsize, budget_bytes)


def channel_attention(x, w1, w2):
    """x: (B, C, H, W) NCHW float.  w1: (C//r, C), w2: (C, C//r) (PyTorch 1x1-conv
    weights with the spatial dims squeezed).  Returns sigmoid attention (B, C, 1, 1)."""
    if not jnp.issubdtype(x.dtype, jnp.floating):
        raise ValueError("channel_attention expects a floating-point input")

    B, C, H, W = x.shape
    HW = H * W
    Cr = w1.shape[0]
    x_flat = x.reshape(B, C, HW)

    # Pre-transpose the 1x1-conv weights once on the host (no in-kernel .T).
    w1_t = jnp.transpose(w1)  # (C, Cr)
    w2_t = jnp.transpose(w2)  # (Cr, C)

    itemsize = jnp.dtype(x.dtype).itemsize
    tile_budget, vmem_limit = _tpu_budgets()
    b_blk, tile_hw = _choose_b_blk_and_tile(B, C, HW, itemsize, tile_budget)

    num_b_steps = B // b_blk
    num_hw_steps = -(-HW // tile_hw)

    kernel = _make_kernel(b_blk, HW, tile_hw, 1.0 / float(HW))

    bytes_accessed = (
        B * C * HW * itemsize                            # activations (dominant)
        + (C * Cr + Cr * C) * jnp.dtype(w1.dtype).itemsize
        + B * C * itemsize                               # output
    )
    cost = pl.CostEstimate(
        flops=2 * B * C * HW + 8 * B * C * Cr,
        transcendentals=B * C,
        bytes_accessed=int(bytes_accessed),
    )

    out = pl.pallas_call(
        kernel,
        out_shape=jax.ShapeDtypeStruct((num_b_steps, b_blk, C), x.dtype),
        grid_spec=pltpu.PrefetchScalarGridSpec(
            num_scalar_prefetch=0,
            grid=(num_b_steps, num_hw_steps),
            in_specs=[
                pl.BlockSpec((b_blk, C, tile_hw), lambda b, k: (b, 0, k)),
                pl.BlockSpec((C, Cr), lambda b, k: (0, 0)),
                pl.BlockSpec((Cr, C), lambda b, k: (0, 0)),
            ],
            out_specs=pl.BlockSpec((1, b_blk, C), lambda b, k: (b, 0, 0)),
            scratch_shapes=[
                pltpu.VMEM((b_blk, C, 128), jnp.float32),  # lane-wide running sum
                pltpu.VMEM((b_blk, C, 128), jnp.float32),  # lane-wide running max
            ],
        ),
        compiler_params=pltpu.CompilerParams(
            dimension_semantics=("parallel", "arbitrary"),
            vmem_limit_bytes=vmem_limit,
        ),
        cost_estimate=cost,
    )(x_flat, w1_t, w2_t)

    return out.reshape(B, C)[:, :, None, None]


def reference(x, w1, w2):
    """Pure-JAX reference matching the PyTorch ChannelAttention forward."""
    avg = jnp.mean(x, axis=(2, 3))  # (B, C)
    mx = jnp.max(x, axis=(2, 3))    # (B, C)

    def mlp(v):
        h = jnp.maximum(v @ w1.T, 0.0)
        return h @ w2.T

    out = jax.nn.sigmoid(mlp(avg) + mlp(mx))
    return out[:, :, None, None]


if __name__ == "__main__":
    # Module config: in_planes=64, ratio=16 -> hidden = 4
    B, C, H, W = 2, 64, 16, 16
    ratio = 16
    Cr = C // ratio

    key = jax.random.PRNGKey(0)
    kx, k1, k2 = jax.random.split(key, 3)

    x = jax.random.normal(kx, (B, C, H, W), dtype=jnp.float32)
    # Bias-free 1x1 conv weights (PyTorch Conv2d weight (out, in, 1, 1) squeezed).
    w1 = jax.random.normal(k1, (Cr, C), dtype=jnp.float32) * 0.1
    w2 = jax.random.normal(k2, (C, Cr), dtype=jnp.float32) * 0.1

    out = channel_attention(x, w1, w2)
    out = jax.block_until_ready(out)

    ref = reference(x, w1, w2)
    assert out.shape == (B, C, 1, 1)
    assert jnp.allclose(out, ref, atol=1e-5, rtol=1e-5), "mismatch vs reference"

    print("KERNEL_OK")
</pallas_src>

<mosaic_0001>
module attributes {stable_mosaic.version = 11 : i64} {
  func.func @kernel(%arg0: i32, %arg1: i32, %arg2: memref<1x64x256xf32, #tpu.memory_space<vmem>>, %arg3: memref<64x4xf32, #tpu.memory_space<vmem>>, %arg4: memref<4x64xf32, #tpu.memory_space<vmem>>, %arg5: memref<1x1x64xf32, #tpu.memory_space<vmem>>, %arg6: memref<1x64x128xf32, #tpu.memory_space<vmem>>, %arg7: memref<1x64x128xf32, #tpu.memory_space<vmem>>) attributes {dimension_semantics = [#tpu.dimension_semantics<parallel>, #tpu.dimension_semantics<arbitrary>], iteration_bounds = array<i64: 2, 1>, scalar_prefetch = 0 : i64, scratch_operands = 2 : i64, tpu.core_type = #tpu.core_type<tc>, window_params = [{transform_indices = @transform_0, window_bounds = array<i64: 1, 64, 256>}, {pipeline_mode = #tpu.pipeline_mode<synchronous>, transform_indices = @transform_1, window_bounds = array<i64: 64, 4>}, {pipeline_mode = #tpu.pipeline_mode<synchronous>, transform_indices = @transform_2, window_bounds = array<i64: 4, 64>}, {transform_indices = @transform_3, window_bounds = array<i64: 1, 1, 64>}]} {
    %c0_i32 = arith.constant 0 : i32
    %0 = arith.cmpi eq, %arg1, %c0_i32 : i32
    %1 = arith.extui %0 : i1 to i32
    %c0_i32_0 = arith.constant 0 : i32
    %2 = arith.cmpi ne, %1, %c0_i32_0 : i32
    scf.if %2 {
      %cst = arith.constant 0.000000e+00 : f32
      %20 = vector.broadcast %cst : f32 to vector<1x64x128xf32>
      %c0_31 = arith.constant 0 : index
      %c0_32 = arith.constant 0 : index
      %c0_33 = arith.constant 0 : index
      %21 = vector.load %arg6[%c0_31, %c0_32, %c0_33] : memref<1x64x128xf32, #tpu.memory_space<vmem>>, vector<1x64x128xf32>
      tpu.vector_store %arg6[%c0_31, %c0_32, %c0_33], %20 {strides = array<i32>} : memref<1x64x128xf32, #tpu.memory_space<vmem>>, vector<1x64x128xf32>,
      %cst_34 = arith.constant 0xFF800000 : f32
      %22 = vector.broadcast %cst_34 : f32 to vector<1x64x128xf32>
      %c0_35 = arith.constant 0 : index
      %c0_36 = arith.constant 0 : index
      %c0_37 = arith.constant 0 : index
      %23 = vector.load %arg7[%c0_35, %c0_36, %c0_37] : memref<1x64x128xf32, #tpu.memory_space<vmem>>, vector<1x64x128xf32>
      tpu.vector_store %arg7[%c0_35, %c0_36, %c0_37], %22 {strides = array<i32>} : memref<1x64x128xf32, #tpu.memory_space<vmem>>, vector<1x64x128xf32>,
    } else {
    }
    %c0 = arith.constant 0 : index
    %c0_1 = arith.constant 0 : index
    %c0_2 = arith.constant 0 : index
    %3 = vector.load %arg2[%c0, %c0_1, %c0_2] : memref<1x64x256xf32, #tpu.memory_space<vmem>>, vector<1x64x128xf32>
    %c0_3 = arith.constant 0 : index
    %c0_4 = arith.constant 0 : index
    %c0_5 = arith.constant 0 : index
    %4 = vector.load %arg6[%c0_3, %c0_4, %c0_5] : memref<1x64x128xf32, #tpu.memory_space<vmem>>, vector<1x64x128xf32>
    %5 = arith.addf %4, %3 : vector<1x64x128xf32>
    %c0_6 = arith.constant 0 : index
    %c0_7 = arith.constant 0 : index
    %c0_8 = arith.constant 0 : index
    %6 = vector.load %arg6[%c0_6, %c0_7, %c0_8] : memref<1x64x128xf32, #tpu.memory_space<vmem>>, vector<1x64x128xf32>
    tpu.vector_store %arg6[%c0_6, %c0_7, %c0_8], %5 {strides = array<i32>} : memref<1x64x128xf32, #tpu.memory_space<vmem>>, vector<1x64x128xf32>,
    %c0_9 = arith.constant 0 : index
    %c0_10 = arith.constant 0 : index
    %c0_11 = arith.constant 0 : index
    %7 = vector.load %arg7[%c0_9, %c0_10, %c0_11] : memref<1x64x128xf32, #tpu.memory_space<vmem>>, vector<1x64x128xf32>
    %8 = arith.maximumf %7, %3 : vector<1x64x128xf32>
    %c0_12 = arith.constant 0 : index
    %c0_13 = arith.constant 0 : index
    %c0_14 = arith.constant 0 : index
    %9 = vector.load %arg7[%c0_12, %c0_13, %c0_14] : memref<1x64x128xf32, #tpu.memory_space<vmem>>, vector<1x64x128xf32>
    tpu.vector_store %arg7[%c0_12, %c0_13, %c0_14], %8 {strides = array<i32>} : memref<1x64x128xf32, #tpu.memory_space<vmem>>, vector<1x64x128xf32>,
    %c0_15 = arith.constant 0 : index
    %c0_16 = arith.constant 0 : index
    %c128 = arith.constant 128 : index
    %10 = vector.load %arg2[%c0_15, %c0_16, %c128] : memref<1x64x256xf32, #tpu.memory_space<vmem>>, vector<1x64x128xf32>
    %c0_17 = arith.constant 0 : index
    %c0_18 = arith.constant 0 : index
    %c0_19 = arith.constant 0 : index
    %11 = vector.load %arg6[%c0_17, %c0_18, %c0_19] : memref<1x64x128xf32, #tpu.memory_space<vmem>>, vector<1x64x128xf32>
    %12 = arith.addf %11, %10 : vector<1x64x128xf32>
    %c0_20 = arith.constant 0 : index
    %c0_21 = arith.constant 0 : index
    %c0_22 = arith.constant 0 : index
    %13 = vector.load %arg6[%c0_20, %c0_21, %c0_22] : memref<1x64x128xf32, #tpu.memory_space<vmem>>, vector<1x64x128xf32>
    tpu.vector_store %arg6[%c0_20, %c0_21, %c0_22], %12 {strides = array<i32>} : memref<1x64x128xf32, #tpu.memory_space<vmem>>, vector<1x64x128xf32>,
    %c0_23 = arith.constant 0 : index
    %c0_24 = arith.constant 0 : index
    %c0_25 = arith.constant 0 : index
    %14 = vector.load %arg7[%c0_23, %c0_24, %c0_25] : memref<1x64x128xf32, #tpu.memory_space<vmem>>, vector<1x64x128xf32>
    %15 = arith.maximumf %14, %10 : vector<1x64x128xf32>
    %c0_26 = arith.constant 0 : index
    %c0_27 = arith.constant 0 : index
    %c0_28 = arith.constant 0 : index
    %16 = vector.load %arg7[%c0_26, %c0_27, %c0_28] : memref<1x64x128xf32, #tpu.memory_space<vmem>>, vector<1x64x128xf32>
    tpu.vector_store %arg7[%c0_26, %c0_27, %c0_28], %15 {strides = array<i32>} : memref<1x64x128xf32, #tpu.memory_space<vmem>>, vector<1x64x128xf32>,
    %c0_i32_29 = arith.constant 0 : i32
    %17 = arith.cmpi eq, %arg1, %c0_i32_29 : i32
    %18 = arith.extui %17 : i1 to i32
    %c0_i32_30 = arith.constant 0 : i32
    %19 = arith.cmpi ne, %18, %c0_i32_30 : i32
    scf.if %19 {
      %c0_31 = arith.constant 0 : index
      %c0_32 = arith.constant 0 : index
      %c0_33 = arith.constant 0 : index
      %20 = vector.load %arg6[%c0_31, %c0_32, %c0_33] : memref<1x64x128xf32, #tpu.memory_space<vmem>>, vector<1x64x128xf32>
      %cst = arith.constant dense<0.000000e+00> : vector<1x64xf32>
      %21 = vector.multi_reduction <add>, %20, %cst [2] : vector<1x64x128xf32> to vector<1x64xf32>
      %cst_34 = arith.constant 3.906250e-03 : f32
      %22 = vector.broadcast %cst_34 : f32 to vector<1x64xf32>
      %23 = arith.mulf %21, %22 : vector<1x64xf32>
      %c0_35 = arith.constant 0 : index
      %c0_36 = arith.constant 0 : index
      %c0_37 = arith.constant 0 : index
      %24 = vector.load %arg7[%c0_35, %c0_36, %c0_37] : memref<1x64x128xf32, #tpu.memory_space<vmem>>, vector<1x64x128xf32>
      %cst_38 = arith.constant dense<0xFF800000> : vector<1x64xf32>
      %25 = vector.multi_reduction <maximumf>, %24, %cst_38 [2] : vector<1x64x128xf32> to vector<1x64xf32>
      %26 = tpu.concatenate %23, %25 in 0 : vector<1x64xf32>, vector<1x64xf32> -> vector<2x64xf32>
      %c0_39 = arith.constant 0 : index
      %c0_40 = arith.constant 0 : index
      %27 = vector.load %arg3[%c0_39, %c0_40] : memref<64x4xf32, #tpu.memory_space<vmem>>, vector<64x4xf32>
      %c0_41 = arith.constant 0 : index
      %c0_42 = arith.constant 0 : index
      %28 = vector.load %arg4[%c0_41, %c0_42] : memref<4x64xf32, #tpu.memory_space<vmem>>, vector<4x64xf32>
      %cst_43 = arith.constant dense<0.000000e+00> : vector<2x4xf32>
      %29 = tpu.matmul %26, %27, %cst_43 {dimension_numbers = #tpu.dot_dimension_numbers<[1], [0], [0], [1], [0, 0, 1, 1], [], []>} : vector<2x64xf32>, vector<64x4xf32>, vector<2x4xf32> -> vector<2x4xf32>
      %cst_44 = arith.constant 0.000000e+00 : f32
      %30 = vector.broadcast %cst_44 : f32 to vector<2x4xf32>
      %31 = arith.maximumf %29, %30 : vector<2x4xf32>
      %cst_45 = arith.constant dense<0.000000e+00> : vector<2x64xf32>
      %32 = tpu.matmul %31, %28, %cst_45 {dimension_numbers = #tpu.dot_dimension_numbers<[1], [0], [0], [1], [0, 0, 1, 1], [], []>} : vector<2x4xf32>, vector<4x64xf32>, vector<2x64xf32> -> vector<2x64xf32>
      %33 = vector.extract_strided_slice %32 {offsets = [0, 0], sizes = [1, 64], strides = [1, 1]} : vector<2x64xf32> to vector<1x64xf32>
      %34 = vector.extract_strided_slice %32 {offsets = [1, 0], sizes = [1, 64], strides = [1, 1]} : vector<2x64xf32> to vector<1x64xf32>
      %35 = arith.addf %33, %34 : vector<1x64xf32>
      %36 = arith.negf %35 : vector<1x64xf32>
      %37 = math.exp %36 : vector<1x64xf32>
      %cst_46 = arith.constant 1.000000e+00 : f32
      %38 = vector.broadcast %cst_46 : f32 to vector<1x64xf32>
      %39 = arith.addf %38, %37 : vector<1x64xf32>
      %40 = arith.divf %38, %39 : vector<1x64xf32>
      %41 = vector.shape_cast %40 : vector<1x64xf32> to vector<1x1x64xf32>
      %c0_47 = arith.constant 0 : index
      %c0_48 = arith.constant 0 : index
      %c0_49 = arith.constant 0 : index
      %42 = vector.load %arg5[%c0_47, %c0_48, %c0_49] : memref<1x1x64xf32, #tpu.memory_space<vmem>>, vector<1x1x64xf32>
      tpu.vector_store %arg5[%c0_47, %c0_48, %c0_49], %41 {strides = array<i32>} : memref<1x1x64xf32, #tpu.memory_space<vmem>>, vector<1x1x64xf32>,
    } else {
    }
    return
  }
  func.func @transform_0(%arg0: i32, %arg1: i32) -> (i32, i32, i32) {
    %c0_i32 = arith.constant 0 : i32
    %c0_i32_0 = arith.constant 0 : i32
    return %arg0, %c0_i32, %arg1 : i32, i32, i32
  }
  func.func @transform_1(%arg0: i32, %arg1: i32) -> (i32, i32) {
    %c0_i32 = arith.constant 0 : i32
    %c0_i32_0 = arith.constant 0 : i32
    %c0_i32_1 = arith.constant 0 : i32
    return %c0_i32, %c0_i32_0 : i32, i32
  }
  func.func @transform_2(%arg0: i32, %arg1: i32) -> (i32, i32) {
    %c0_i32 = arith.constant 0 : i32
    %c0_i32_0 = arith.constant 0 : i32
    %c0_i32_1 = arith.constant 0 : i32
    return %c0_i32, %c0_i32_0 : i32, i32
  }
  func.func @transform_3(%arg0: i32, %arg1: i32) -> (i32, i32, i32) {
    %c0_i32 = arith.constant 0 : i32
    %c0_i32_0 = arith.constant 0 : i32
    %c0_i32_1 = arith.constant 0 : i32
    return %arg0, %c0_i32, %c0_i32_0 : i32, i32, i32
  }
}

</mosaic_0001>

<llo_original>
// kernel: tpu_custom_call.1
$region0: #{tpu_custom_call.1}
  #allocation0 [shape = 'u32[]', space=smem, size = 0x4, offset = 0x4, fixed_abs, tag = 'smem constant byte address 0x4 - core index']
  #allocation1 [shape = 'u32[72,128]{1,0:T(1,128)}', space=vmem, size = 0x9000, scoped, tag = 'internal scratch']
  #allocation2 [shape = 'f32[1,64,128]{2,1,0:T(8,128)}', space=vmem, size = 0x8000, scoped, tag = 'scratch operand']
  #allocation3 [shape = 'f32[1,64,128]{2,1,0:T(8,128)}', space=vmem, size = 0x8000, scoped, tag = 'scratch operand']
  %s0 = inlined_call_operand.hbm [shape: f32[2,64,256], index: 0, kind: input, shape index: {}]
  %s1 = inlined_call_operand.vmem [shape: f32[64,4], index: 1, kind: input, shape index: {}]
  %s2 = inlined_call_operand.vmem [shape: f32[4,64], index: 2, kind: input, shape index: {}]
  %s3 = inlined_call_operand.hbm [shape: f32[2,1,64], index: 3, kind: output, shape index: {}]
  %s4 = sld [smem:[#allocation0]]
  $region57: #{tpu_custom_call.1} parent=0
    _
  %s6 = ssub.s32 1, %s4
  %s7 = scalar_select 0, %s6, %s4
  $region1: #{tpu_custom_call.1} parent=0
    #allocation4 [shape = 'u8[131072]{0}', space=vmem, size = 0x20000, scoped, tag = 'input window, operand 0']
    #allocation5 [shape = 's32[2]{0}', space=sflag, size = 0x8, scoped, tag = 'scoped memory for tpu_custom_call.1']
    #allocation6 [shape = 's32[2]{0}', space=sflag, size = 0x8, scoped, tag = 'scoped memory for tpu_custom_call.1']
    #allocation7 [shape = 'u8[1024]{0}', space=vmem, size = 0x400, scoped, tag = 'output window, operand 0']
    %8 = vsyncpa [#allocation5], 0
    %s9 = scalar_lea.sflag [#allocation5], 1
    %10 = vsyncpa %s9, 0
    %11 = vsyncpa [#allocation6], 0
    %s12 = scalar_lea.sflag [#allocation6], 1
    %13 = vsyncpa %s12, 0
    loop: start=0, step=1, limit=4
    $region2: #{tpu_custom_call.1} parent=1 // loop_pre_header
      _
    $region3: #{tpu_custom_call.1} parent=1 // loop_header
      %s15 = sphi 0, %s19
      %p16 = scmp.ge.s32.totalorder %s15, 4
      %s22 = sphi 0, %s34
      %s23 = sphi 0, %s30
      %s24 = sphi 0, %s22
      %s25 = sphi 0, %s23
      %s26 = sphi 0, %s24
      %s27 = sphi 0, %s25
      %s39 = sphi 0, %s41
      %s42 = sphi 0, %s39
      %s43 = sphi 0, %s42
      %s59 = sphi 0, %s43
      %s63 = sphi 0, %s63
      %s65 = sphi 0, %s63
      %s66 = sphi 0, %s65
      %s80 = sphi 0, %s66
      %s84 = sphi 0, %s84
      %s86 = sphi 0, %s84
      %s87 = sphi 0, %s86
      %s101 = sphi 0, %s87
      %s107 = sphi 0, %s109
      %s110 = sphi 0, %s107
      %s111 = sphi 0, %s110
      %s127 = sphi 0, %s111
    $region4: #{tpu_custom_call.1} parent=1 // loop_header_branch
      %18 = sbr.rel (%p16) target = $region8
    $region5: #{tpu_custom_call.1} parent=1 // loop_body
      %s20 = ssub.s32 %s15, 1
      %s21 = ssub.s32 %s15, 2
      %s28 = sadd.s32 1, %s23
      %p29 = scmp.ge.s32.totalorder %s28, 1
      %s30 = scalar_select %p29, 0, %s28
      %s31 = sadd.s32 1, %s22
      %s32 = scalar_select %p29, %s31, %s22
      %p33 = scmp.ge.s32.totalorder %s32, 2
      %s34 = scalar_select %p33, 0, %s32
      %s35 = ssub.s32 %s22, %s34
      %s36 = ssub.s32 %s23, %s30
      %s37 = sor.u32 %s35, %s36
      %p38 = scmp.eq.s32.totalorder %s37, 0
      %s40 = sadd.s32 %s39, 1
      %s41 = scalar_select %p38, %s39, %s40
      %p44 = pneg %p38
      %p45 = scmp.eq.s32.totalorder %s15, 1
      %p46 = por %p44, %p45
      %p47 = scmp.ne.s32.totalorder %s39, %s42
      %p48 = scmp.eq.s32.totalorder %s15, 0
      %p49 = por %p47, %p48
      %p50 = scmp.ne.s32.totalorder %s39, %s42
      %p51 = scmp.eq.s32.totalorder %s20, 1
      %p52 = por %p50, %p51
      %p53 = scmp.ne.s32.totalorder %s42, %s43
      %p54 = scmp.eq.s32.totalorder %s20, 0
      %p55 = por %p53, %p54
      %p56 = scmp.ne.s32.totalorder %s42, %s43
      %p57 = scmp.eq.s32.totalorder %s21, 1
      %p58 = por %p56, %p57
      %p60 = scmp.ne.s32.totalorder %s43, %s59
      %p61 = scmp.eq.s32.totalorder %s21, 0
      %p62 = por %p60, %p61
      %s64 = sadd.s32 %s63, 1
      %p67 = scmp.eq.s32.totalorder %s15, 1
      %p68 = scmp.ne.s32.totalorder %s63, %s65
      %p69 = scmp.eq.s32.totalorder %s15, 0
      %p70 = por %p68, %p69
      %p71 = scmp.ne.s32.totalorder %s63, %s65
      %p72 = scmp.eq.s32.totalorder %s20, 1
      %p73 = por %p71, %p72
      %p74 = scmp.ne.s32.totalorder %s65, %s66
      %p75 = scmp.eq.s32.totalorder %s20, 0
      %p76 = por %p74, %p75
      %p77 = scmp.ne.s32.totalorder %s65, %s66
      %p78 = scmp.eq.s32.totalorder %s21, 1
      %p79 = por %p77, %p78
      %p81 = scmp.ne.s32.totalorder %s66, %s80
      %p82 = scmp.eq.s32.totalorder %s21, 0
      %p83 = por %p81, %p82
      %s85 = sadd.s32 %s84, 1
      %p88 = scmp.eq.s32.totalorder %s15, 1
      %p89 = scmp.ne.s32.totalorder %s84, %s86
      %p90 = scmp.eq.s32.totalorder %s15, 0
      %p91 = por %p89, %p90
      %p92 = scmp.ne.s32.totalorder %s84, %s86
      %p93 = scmp.eq.s32.totalorder %s20, 1
      %p94 = por %p92, %p93
      %p95 = scmp.ne.s32.totalorder %s86, %s87
      %p96 = scmp.eq.s32.totalorder %s20, 0
      %p97 = por %p95, %p96
      %p98 = scmp.ne.s32.totalorder %s86, %s87
      %p99 = scmp.eq.s32.totalorder %s21, 1
      %p100 = por %p98, %p99
      %p102 = scmp.ne.s32.totalorder %s87, %s101
      %p103 = scmp.eq.s32.totalorder %s21, 0
      %p104 = por %p102, %p103
      %s105 = ssub.s32 %s22, %s34
      %p106 = scmp.eq.s32.totalorder %s105, 0
      %s108 = sadd.s32 %s107, 1
      %s109 = scalar_select %p106, %s107, %s108
      %p112 = pneg %p106
      %p113 = scmp.eq.s32.totalorder %s15, 1
      %p114 = por %p112, %p113
      %p115 = scmp.ne.s32.totalorder %s107, %s110
      %p116 = scmp.eq.s32.totalorder %s15, 0
      %p117 = por %p115, %p116
      %p118 = scmp.ne.s32.totalorder %s107, %s110
      %p119 = scmp.eq.s32.totalorder %s20, 1
      %p120 = por %p118, %p119
      %p121 = scmp.ne.s32.totalorder %s110, %s111
      %p122 = scmp.eq.s32.totalorder %s20, 0
      %p123 = por %p121, %p122
      %p124 = scmp.ne.s32.totalorder %s110, %s111
      %p125 = scmp.eq.s32.totalorder %s21, 1
      %p126 = por %p124, %p125
      %p128 = scmp.ne.s32.totalorder %s111, %s127
      %p129 = scmp.eq.s32.totalorder %s21, 0
      %p130 = por %p128, %p129
      %p131 = scmp.le.s32.totalorder 1, %s15
      %p132 = scmp.lt.s32.totalorder %s15, 3
      %p133 = pnand %p131, %p132
      %p134 = pneg %p133
      // Predicated region
      $region9: #{tpu_custom_call.1} parent=5 // pred_check
        _
      $region10: #{tpu_custom_call.1} parent=5 // pred_check_branch
        %136 = sbr.rel (%p133) target = $region12
      $region11: #{tpu_custom_call.1} parent=5 // pred_region
        %s137 = ssub.s32 %s15, 1
        // Predicated region
        $region13: #{tpu_custom_call.1} parent=11 // pred_check
          %p138 = pneg %p76
        $region14: #{tpu_custom_call.1} parent=11 // pred_check_branch
          %140 = sbr.rel (%p138) target = $region16
        $region15: #{tpu_custom_call.1} parent=11 // pred_region
          _
        $region16: #{tpu_custom_call.1} parent=11 // pred_fallthru
          _
        // Predicated region
        $region17: #{tpu_custom_call.1} parent=11 // pred_check
          %p141 = pneg %p97
        $region18: #{tpu_custom_call.1} parent=11 // pred_check_branch
          %143 = sbr.rel (%p141) target = $region20
        $region19: #{tpu_custom_call.1} parent=11 // pred_region
          _
        $region20: #{tpu_custom_call.1} parent=11 // pred_fallthru
          _
      $region12: #{tpu_custom_call.1} parent=5 // pred_fallthru
        _
      %p144 = scmp.lt.s32.totalorder %s15, 2
      // Predicated region
      $region21: #{tpu_custom_call.1} parent=5 // pred_check
        %p145 = pneg %p144
      $region22: #{tpu_custom_call.1} parent=5 // pred_check_branch
        %147 = sbr.rel (%p145) target = $region24
      $region23: #{tpu_custom_call.1} parent=5 // pred_region
        // Predicated region
        $region25: #{tpu_custom_call.1} parent=23 // pred_check
          %p148 = pneg %p49
        $region26: #{tpu_custom_call.1} parent=23 // pred_check_branch
          %150 = sbr.rel (%p148) target = $region28
        $region27: #{tpu_custom_call.1} parent=23 // pred_region
          %s151 = sand.u32 %s39, 1
          %s152 = scalar_lea.sflag [#allocation5], %s151
          %s153 = sand.u32 %s39, 1
          %s154 = smul.addr %s153, 128
          %s155 = scalar_lea.vmem [#allocation4], %s154
          %s156 = smul.u32 2, %s23
          %158 = vsyncadd %s152, 0
          %s159 = smul.addr %s22, 16
          %s160 = sadd.s32 %s156, %s159
          %s161 = smul.addr %s160, 8
          %s162 = scalar_lea.hbm %s0, %s161
          %s163 = sshll.u32 %s162, 4
          %s164 = int_to_ptr.hbm [resolvable:$true] %s163
          %s165 = sshll.u32 %s155, 4
          %s166 = int_to_ptr.vmem [resolvable:$true] %s165
          %171 = dma.hbm_to_vmem [thread:$0]  %s164, 2048, %s166, %s152, 256, 256, 16
        $region28: #{tpu_custom_call.1} parent=23 // pred_fallthru
          _
      $region24: #{tpu_custom_call.1} parent=5 // pred_fallthru
        _
      %p172 = scmp.le.s32.totalorder 1, %s15
      %p173 = scmp.lt.s32.totalorder %s15, 3
      %p174 = pnand %p172, %p173
      %p175 = pneg %p174
      // Predicated region
      $region29: #{tpu_custom_call.1} parent=5 // pred_check
        _
      $region30: #{tpu_custom_call.1} parent=5 // pred_check_branch
        %177 = sbr.rel (%p174) target = $region32
      $region31: #{tpu_custom_call.1} parent=5 // pred_region
        %s178 = ssub.s32 %s15, 1
        %s179 = sand.u32 %s42, 1
        %s180 = scalar_lea.sflag [#allocation5], %s179
        %s181 = sand.u32 %s42, 1
        %s182 = smul.addr %s181, 128
        %s183 = scalar_lea.vmem [#allocation4], %s182
        // Predicated region
        $region33: #{tpu_custom_call.1} parent=31 // pred_check
          %p184 = pneg %p55
        $region34: #{tpu_custom_call.1} parent=31 // pred_check_branch
          %186 = sbr.rel (%p184) target = $region36
        $region35: #{tpu_custom_call.1} parent=31 // pred_region
          %188 = dma.done %s180, 2048
        $region36: #{tpu_custom_call.1} parent=31 // pred_fallthru
          _
        %s189 = sand.u32 %s42, 1
        %s190 = scalar_lea.sflag [#allocation5], %s189
        %s191 = sand.u32 %s42, 1
        %s192 = smul.addr %s191, 128
        %s193 = scalar_lea.vmem [#allocation4], %s192
        %p194 = pneg %p55
        %p195 = pneg %p52
        %p196 = pneg %p76
        %p197 = pneg %p73
        %p198 = pneg %p97
        %p199 = pneg %p94
        %p200 = pneg %p123
        %p201 = pneg %p120
        %s202 = sand.u32 %s110, 1
        %s203 = scalar_lea.sflag [#allocation6], %s202
        %s204 = sand.u32 %s110, 1
        %s205 = scalar_lea.vmem [#allocation7], %s204
        %s206 = smul.u32 2, %s25
        %p207 = scmp.eq.s32.totalorder %s25, 0
        // Predicated region
        $region37: #{tpu_custom_call.1} parent=31 // pred_check
          %p208 = pneg %p207
        $region38: #{tpu_custom_call.1} parent=31 // pred_check_branch
          %210 = sbr.rel (%p208) target = $region40
        $region39: #{tpu_custom_call.1} parent=31 // pred_region
          %211 = vst [vmem:[#allocation2] sm:$0xff] 0.0
          %212 = vst [vmem:[#allocation2 + $0x8] sm:$0xff] 0.0
          %213 = vst [vmem:[#allocation2 + $0x10] sm:$0xff] 0.0
          %214 = vst [vmem:[#allocation2 + $0x18] sm:$0xff] 0.0
          %215 = vst [vmem:[#allocation2 + $0x20] sm:$0xff] 0.0
          %216 = vst [vmem:[#allocation2 + $0x28] sm:$0xff] 0.0
          %217 = vst [vmem:[#allocation2 + $0x30] sm:$0xff] 0.0
          %218 = vst [vmem:[#allocation2 + $0x38] sm:$0xff] 0.0
          %219 = vst [vmem:[#allocation3] sm:$0xff] -inf
          %220 = vst [vmem:[#allocation3 + $0x8] sm:$0xff] -inf
          %221 = vst [vmem:[#allocation3 + $0x10] sm:$0xff] -inf
          %222 = vst [vmem:[#allocation3 + $0x18] sm:$0xff] -inf
          %223 = vst [vmem:[#allocation3 + $0x20] sm:$0xff] -inf
          %224 = vst [vmem:[#allocation3 + $0x28] sm:$0xff] -inf
          %225 = vst [vmem:[#allocation3 + $0x30] sm:$0xff] -inf
          %226 = vst [vmem:[#allocation3 + $0x38] sm:$0xff] -inf
        $region40: #{tpu_custom_call.1} parent=31 // pred_fallthru
          _
        %v227 = vld [vmem:[%s183] sm:$0xff]
        %v228 = vld [vmem:[%s183 + $0x10] sm:$0xff]
        %v229 = vld [vmem:[%s183 + $0x20] sm:$0xff]
        %v230 = vld [vmem:[%s183 + $0x30] sm:$0xff]
        %v231 = vld [vmem:[%s183 + $0x40] sm:$0xff]
        %v232 = vld [vmem:[%s183 + $0x50] sm:$0xff]
        %v233 = vld [vmem:[%s183 + $0x60] sm:$0xff]
        %v234 = vld [vmem:[%s183 + $0x70] sm:$0xff]
        %v235 = vld [vmem:[#allocation2] sm:$0xff]
        %v236 = vld [vmem:[#allocation2 + $0x8] sm:$0xff]
        %v237 = vld [vmem:[#allocation2 + $0x10] sm:$0xff]
        %v238 = vld [vmem:[#allocation2 + $0x18] sm:$0xff]
        %v239 = vld [vmem:[#allocation2 + $0x20] sm:$0xff]
        %v240 = vld [vmem:[#allocation2 + $0x28] sm:$0xff]
        %v241 = vld [vmem:[#allocation2 + $0x30] sm:$0xff]
        %v242 = vld [vmem:[#allocation2 + $0x38] sm:$0xff]
        %v243 = vadd.f32 %v235, %v227
        %v244 = vadd.f32 %v236, %v228
        %v245 = vadd.f32 %v237, %v229
        %v246 = vadd.f32 %v238, %v230
        %v247 = vadd.f32 %v239, %v231
        %v248 = vadd.f32 %v240, %v232
        %v249 = vadd.f32 %v241, %v233
        %v250 = vadd.f32 %v242, %v234
        %251 = vst [vmem:[#allocation2] sm:$0xff] %v243
        %252 = vst [vmem:[#allocation2 + $0x8] sm:$0xff] %v244
        %253 = vst [vmem:[#allocation2 + $0x10] sm:$0xff] %v245
        %254 = vst [vmem:[#allocation2 + $0x18] sm:$0xff] %v246
        %255 = vst [vmem:[#allocation2 + $0x20] sm:$0xff] %v247
        %256 = vst [vmem:[#allocation2 + $0x28] sm:$0xff] %v248
        %257 = vst [vmem:[#allocation2 + $0x30] sm:$0xff] %v249
        %258 = vst [vmem:[#allocation2 + $0x38] sm:$0xff] %v250
        %v259 = vld [vmem:[#allocation3] sm:$0xff]
        %v260 = vld [vmem:[#allocation3 + $0x8] sm:$0xff]
        %v261 = vld [vmem:[#allocation3 + $0x10] sm:$0xff]
        %v262 = vld [vmem:[#allocation3 + $0x18] sm:$0xff]
        %v263 = vld [vmem:[#allocation3 + $0x20] sm:$0xff]
        %v264 = vld [vmem:[#allocation3 + $0x28] sm:$0xff]
        %v265 = vld [vmem:[#allocation3 + $0x30] sm:$0xff]
        %v266 = vld [vmem:[#allocation3 + $0x38] sm:$0xff]
        %v267 = vmax.f32 %v259, %v227
        %v268 = vmax.f32 %v260, %v228
        %v269 = vmax.f32 %v261, %v229
        %v270 = vmax.f32 %v262, %v230
        %v271 = vmax.f32 %v263, %v231
        %v272 = vmax.f32 %v264, %v232
        %v273 = vmax.f32 %v265, %v233
        %v274 = vmax.f32 %v266, %v234
        %275 = vst [vmem:[#allocation3] sm:$0xff] %v267
        %276 = vst [vmem:[#allocation3 + $0x8] sm:$0xff] %v268
        %277 = vst [vmem:[#allocation3 + $0x10] sm:$0xff] %v269
        %278 = vst [vmem:[#allocation3 + $0x18] sm:$0xff] %v270
        %279 = vst [vmem:[#allocation3 + $0x20] sm:$0xff] %v271
        %280 = vst [vmem:[#allocation3 + $0x28] sm:$0xff] %v272
        %281 = vst [vmem:[#allocation3 + $0x30] sm:$0xff] %v273
        %282 = vst [vmem:[#allocation3 + $0x38] sm:$0xff] %v274
        %v283 = vld [vmem:[%s183 + $0x8] sm:$0xff]
        %v284 = vld [vmem:[%s183 + $0x18] sm:$0xff]
        %v285 = vld [vmem:[%s183 + $0x28] sm:$0xff]
        %v286 = vld [vmem:[%s183 + $0x38] sm:$0xff]
        %v287 = vld [vmem:[%s183 + $0x48] sm:$0xff]
        %v288 = vld [vmem:[%s183 + $0x58] sm:$0xff]
        %v289 = vld [vmem:[%s183 + $0x68] sm:$0xff]
        %v290 = vld [vmem:[%s183 + $0x78] sm:$0xff]
        %v291 = vld [vmem:[#allocation2] sm:$0xff]
        %v292 = vld [vmem:[#allocation2 + $0x8] sm:$0xff]
        %v293 = vld [vmem:[#allocation2 + $0x10] sm:$0xff]
        %v294 = vld [vmem:[#allocation2 + $0x18] sm:$0xff]
        %v295 = vld [vmem:[#allocation2 + $0x20] sm:$0xff]
        %v296 = vld [vmem:[#allocation2 + $0x28] sm:$0xff]
        %v297 = vld [vmem:[#allocation2 + $0x30] sm:$0xff]
        %v298 = vld [vmem:[#allocation2 + $0x38] sm:$0xff]
        %v299 = vadd.f32 %v291, %v283
        %v300 = vadd.f32 %v292, %v284
        %v301 = vadd.f32 %v293, %v285
        %v302 = vadd.f32 %v294, %v286
        %v303 = vadd.f32 %v295, %v287
        %v304 = vadd.f32 %v296, %v288
        %v305 = vadd.f32 %v297, %v289
        %v306 = vadd.f32 %v298, %v290
        %307 = vst [vmem:[#allocation2] sm:$0xff] %v299
        %308 = vst [vmem:[#allocation2 + $0x8] sm:$0xff] %v300
        %309 = vst [vmem:[#allocation2 + $0x10] sm:$0xff] %v301
        %310 = vst [vmem:[#allocation2 + $0x18] sm:$0xff] %v302
        %311 = vst [vmem:[#allocation2 + $0x20] sm:$0xff] %v303
        %312 = vst [vmem:[#allocation2 + $0x28] sm:$0xff] %v304
        %313 = vst [vmem:[#allocation2 + $0x30] sm:$0xff] %v305
        %314 = vst [vmem:[#allocation2 + $0x38] sm:$0xff] %v306
        %v315 = vld [vmem:[#allocation3] sm:$0xff]
        %v316 = vld [vmem:[#allocation3 + $0x8] sm:$0xff]
        %v317 = vld [vmem:[#allocation3 + $0x10] sm:$0xff]
        %v318 = vld [vmem:[#allocation3 + $0x18] sm:$0xff]
        %v319 = vld [vmem:[#allocation3 + $0x20] sm:$0xff]
        %v320 = vld [vmem:[#allocation3 + $0x28] sm:$0xff]
        %v321 = vld [vmem:[#allocation3 + $0x30] sm:$0xff]
        %v322 = vld [vmem:[#allocation3 + $0x38] sm:$0xff]
        %v323 = vmax.f32 %v315, %v283
        %v324 = vmax.f32 %v316, %v284
        %v325 = vmax.f32 %v317, %v285
        %v326 = vmax.f32 %v318, %v286
        %v327 = vmax.f32 %v319, %v287
        %v328 = vmax.f32 %v320, %v288
        %v329 = vmax.f32 %v321, %v289
        %v330 = vmax.f32 %v322, %v290
        %331 = vst [vmem:[#allocation3] sm:$0xff] %v323
        %332 = vst [vmem:[#allocation3 + $0x8] sm:$0xff] %v324
        %333 = vst [vmem:[#allocation3 + $0x10] sm:$0xff] %v325
        %334 = vst [vmem:[#allocation3 + $0x18] sm:$0xff] %v326
        %335 = vst [vmem:[#allocation3 + $0x20] sm:$0xff] %v327
        %336 = vst [vmem:[#allocation3 + $0x28] sm:$0xff] %v328
        %337 = vst [vmem:[#allocation3 + $0x30] sm:$0xff] %v329
        %338 = vst [vmem:[#allocation3 + $0x38] sm:$0xff] %v330
        // Predicated region
        $region41: #{tpu_custom_call.1} parent=31 // pred_check
          %p339 = pneg %p207
        $region42: #{tpu_custom_call.1} parent=31 // pred_check_branch
          %341 = sbr.rel (%p339) target = $region44
        $region43: #{tpu_custom_call.1} parent=31 // pred_region
          %v342 = vld [vmem:[#allocation2] sm:$0xff]
          %v343 = vld [vmem:[#allocation2 + $0x8] sm:$0xff]
          %v344 = vld [vmem:[#allocation2 + $0x10] sm:$0xff]
          %v345 = vld [vmem:[#allocation2 + $0x18] sm:$0xff]
          %v346 = vld [vmem:[#allocation2 + $0x20] sm:$0xff]
          %v347 = vld [vmem:[#allocation2 + $0x28] sm:$0xff]
          %v348 = vld [vmem:[#allocation2 + $0x30] sm:$0xff]
          %v349 = vld [vmem:[#allocation2 + $0x38] sm:$0xff]
          %350 = vadd.xlane.f32.xlu0 %v342
          %v351 = vpop.xlane.xlu0 %350
          %352 = vadd.xlane.f32.xlu0 %v343
          %v353 = vpop.xlane.xlu0 %352
          %354 = vadd.xlane.f32.xlu0 %v344
          %v355 = vpop.xlane.xlu0 %354
          %356 = vadd.xlane.f32.xlu0 %v345
          %v357 = vpop.xlane.xlu0 %356
          %358 = vadd.xlane.f32.xlu0 %v346
          %v359 = vpop.xlane.xlu0 %358
          %360 = vadd.xlane.f32.xlu0 %v347
          %v361 = vpop.xlane.xlu0 %360
          %362 = vadd.xlane.f32.xlu0 %v348
          %v363 = vpop.xlane.xlu0 %362
          %364 = vadd.xlane.f32.xlu0 %v349
          %v365 = vpop.xlane.xlu0 %364
          %v366 = vmul.f32 %v351, 0.00390625
          %v367 = vmul.f32 %v353, 0.00390625
          %v368 = vmul.f32 %v355, 0.00390625
          %v369 = vmul.f32 %v357, 0.00390625
          %v370 = vmul.f32 %v359, 0.00390625
          %v371 = vmul.f32 %v361, 0.00390625
          %v372 = vmul.f32 %v363, 0.00390625
          %v373 = vmul.f32 %v365, 0.00390625
          %v374 = vld [vmem:[#allocation3] sm:$0xff]
          %v375 = vld [vmem:[#allocation3 + $0x8] sm:$0xff]
          %v376 = vld [vmem:[#allocation3 + $0x10] sm:$0xff]
          %v377 = vld [vmem:[#allocation3 + $0x18] sm:$0xff]
          %v378 = vld [vmem:[#allocation3 + $0x20] sm:$0xff]
          %v379 = vld [vmem:[#allocation3 + $0x28] sm:$0xff]
          %v380 = vld [vmem:[#allocation3 + $0x30] sm:$0xff]
          %v381 = vld [vmem:[#allocation3 + $0x38] sm:$0xff]
          %382 = vmax.xlane.f32.xlu0 %v374
          %v383 = vpop.xlane.xlu0 %382
          %384 = vmax.xlane.f32.xlu0 %v375
          %v385 = vpop.xlane.xlu0 %384
          %386 = vmax.xlane.f32.xlu0 %v376
          %v387 = vpop.xlane.xlu0 %386
          %388 = vmax.xlane.f32.xlu0 %v377
          %v389 = vpop.xlane.xlu0 %388
          %390 = vmax.xlane.f32.xlu0 %v378
          %v391 = vpop.xlane.xlu0 %390
          %392 = vmax.xlane.f32.xlu0 %v379
          %v393 = vpop.xlane.xlu0 %392
          %394 = vmax.xlane.f32.xlu0 %v380
          %v395 = vpop.xlane.xlu0 %394
          %396 = vmax.xlane.f32.xlu0 %v381
          %v397 = vpop.xlane.xlu0 %396
          %v406 = vlaneseq
          %v407 = vand.u32 %v406, 127
          %v408 = vperm.slane %v366, %v407
          %v409 = vadd.s32 %v407, 4294967288
          %v410 = vperm.slane %v367, %v409
          %vm411 = vcmask 130112
          %v412 = vsel %vm411, %v410, %v408
          %v413 = vadd.s32 %v407, 4294967280
          %v414 = vperm.slane %v368, %v413
          %vm415 = vcmask 195712
          %v416 = vsel %vm415, %v414, %v412
          %v417 = vadd.s32 %v407, 4294967272
          %v418 = vperm.slane %v369, %v417
          %vm419 = vcmask 261312
          %v420 = vsel %vm419, %v418, %v416
          %v421 = vadd.s32 %v407, 4294967264
          %v422 = vperm.slane %v370, %v421
          %vm423 = vcmask 326912
          %v424 = vsel %vm423, %v422, %v420
          %v425 = vadd.s32 %v407, 4294967256
          %v426 = vperm.slane %v371, %v425
          %vm427 = vcmask 392512
          %v428 = vsel %vm427, %v426, %v424
          %v429 = vadd.s32 %v407, 4294967248
          %v430 = vperm.slane %v372, %v429
          %vm431 = vcmask 458112
          %v432 = vsel %vm431, %v430, %v428
          %v433 = vadd.s32 %v407, 4294967240
          %v434 = vperm.slane %v373, %v433
          %vm435 = vcmask 523712
          %v436 = vsel %vm435, %v434, %v432
          %v446 = vperm.slane %v383, %v407
          %v447 = vperm.slane %v385, %v409
          %v448 = vsel %vm411, %v447, %v446
          %v449 = vperm.slane %v387, %v413
          %v450 = vsel %vm415, %v449, %v448
          %v451 = vperm.slane %v389, %v417
          %v452 = vsel %vm419, %v451, %v450
          %v453 = vperm.slane %v391, %v421
          %v454 = vsel %vm423, %v453, %v452
          %v455 = vperm.slane %v393, %v425
          %v456 = vsel %vm427, %v455, %v454
          %v457 = vperm.slane %v395, %v429
          %v458 = vsel %vm431, %v457, %v456
          %v459 = vperm.slane %v397, %v433
          %v460 = vsel %vm435, %v459, %v458
          %vm462 = vcmask 1040384
          %v463 = vsel %vm462, %v436, %v460
          %v464 = vld [vmem:[%s1] sm:$0xff]
          %v465 = vld [vmem:[%s1 + $0x8] sm:$0xff]
          %v466 = vld [vmem:[%s1 + $0x10] sm:$0xff]
          %v467 = vld [vmem:[%s1 + $0x18] sm:$0xff]
          %v468 = vld [vmem:[%s1 + $0x20] sm:$0xff]
          %v469 = vld [vmem:[%s1 + $0x28] sm:$0xff]
          %v470 = vld [vmem:[%s1 + $0x30] sm:$0xff]
          %v471 = vld [vmem:[%s1 + $0x38] sm:$0xff]
          %v472 = vld [vmem:[%s2] sm:$0xf]
          %vm473 = vcmask 523264
          %v475 = vsel %vm473, %v463, 0
          %477 = vmatpush.msra.mxu0 0.0
          %478 = vmatpush.msra.mxu0 0.0
          %479 = vmatpush.msra.mxu0 0.0
          %480 = vmatpush.msra.mxu0 0.0
          %481 = vmatpush.msra.mxu0 0.0
          %482 = vmatpush.msra.mxu0 0.0
          %483 = vmatpush.msra.mxu0 0.0
          %484 = vmatpush.msra.mxu0 0.0
          %485 = vmatpush.msra.mxu0 %v471
          %486 = vmatpush.msra.mxu0 %v470
          %487 = vmatpush.msra.mxu0 %v469
          %488 = vmatpush.msra.mxu0 %v468
          %489 = vmatpush.msra.mxu0 %v467
          %490 = vmatpush.msra.mxu0 %v466
          %491 = vmatpush.msra.mxu0 %v465
          %492 = vmatpush.msra.mxu0 %v464
          %493 = vmatmul.f32.gmra.mxu0 %v475
          %v494 = vpop.f32.mrf.mxu0
          %v495 = vadd.f32 0.0, %v494
          %496 = vdwg.mxu0
          %v497 = vmax.f32 %v495, 0.0
          %vm498 = vcmask 31744
          %v500 = vsel %vm498, %v497, 0
          %vm502 = vcmask 1043456
          %v504 = vsel %vm502, %v472, 0
          %506 = vmatpush.msra.mxu0 0.0
          %507 = vmatpush.msra.mxu0 0.0
          %508 = vmatpush.msra.mxu0 0.0
          %509 = vmatpush.msra.mxu0 0.0
          %510 = vmatpush.msra.mxu0 0.0
          %511 = vmatpush.msra.mxu0 0.0
          %512 = vmatpush.msra.mxu0 0.0
          %513 = vmatpush.msra.mxu0 0.0
          %514 = vmatpush.msra.mxu0 0.0
          %515 = vmatpush.msra.mxu0 0.0
          %516 = vmatpush.msra.mxu0 0.0
          %517 = vmatpush.msra.mxu0 0.0
          %518 = vmatpush.msra.mxu0 0.0
          %519 = vmatpush.msra.mxu0 0.0
          %520 = vmatpush.msra.mxu0 0.0
          %521 = vmatpush.msra.mxu0 %v504
          %522 = vmatmul.f32.gmra.mxu0 %v500
          %v523 = vpop.f32.mrf.mxu0
          %v524 = vadd.f32 0.0, %v523
          %525 = vdwg.mxu0
          %v527 = vrot.slane %v524, 1
          %v529 = vadd.f32 %v524, %v527
          %v530 = vxor.u32 %v529, 2147483648
          %v531 = vmul.f32 %v530, 1.442695
          %v532 = vpow.pop %v531
          %v533 = vadd.f32 %v532, 1.0
          %v534 = vrcp.pop %v533
          %v535 = vmul.f32 %v533, %v534
          %v536 = vsub.f32 1.0, %v535
          %v537 = vmul.f32 %v534, %v536
          %v538 = vadd.f32 %v534, %v537
          %vm539 = vweird.f32 %v533
          %vm540 = vweird.f32 %v534
          %vm541 = vmor %vm539, %vm540
          %v542 = vsel %vm541, %v534, %v538
          %v543 = vand.u32 2147483647, %v533
          %vm544 = vcmp.eq.f32.partialorder %v543, 8.507059e+37
          %v545 = vand.u32 %v533, 2147483648
          %v546 = vor.u32 1.1754944e-38, %v545
          %v547 = vsel %vm544, %v546, %v542
          %v548 = vmul.f32 1.0, %v547
          %vm549 = vcmask 516096
          %550 = vst.msk [vmem:[%s205] sm:$0x1] %vm549, %v548
        $region44: #{tpu_custom_call.1} parent=31 // pred_fallthru
          _
        %s551 = sand.u32 %s110, 1
        %s552 = scalar_lea.sflag [#allocation6], %s551
        %s553 = sand.u32 %s110, 1
        %s554 = scalar_lea.vmem [#allocation7], %s553
        // Predicated region
        $region45: #{tpu_custom_call.1} parent=31 // pred_check
          %p555 = pneg %p120
        $region46: #{tpu_custom_call.1} parent=31 // pred_check_branch
          %557 = sbr.rel (%p555) target = $region48
        $region47: #{tpu_custom_call.1} parent=31 // pred_region
          %559 = vsyncadd %s552, 0
          %s560 = scalar_lea.hbm %s3, %s24
          %s562 = sshll.u32 %s554, 4
          %s563 = int_to_ptr.vmem [resolvable:$true] %s562
          %s564 = sshll.u32 %s560, 4
          %s565 = int_to_ptr.hbm [resolvable:$true] %s564
          %567 = dma.vmem_to_hbm [thread:$0]  %s563, 16, %s565, %s552
        $region48: #{tpu_custom_call.1} parent=31 // pred_fallthru
          _
      $region32: #{tpu_custom_call.1} parent=5 // pred_fallthru
        _
      %p568 = scmp.le.s32.totalorder 2, %s15
      // Predicated region
      $region49: #{tpu_custom_call.1} parent=5 // pred_check
        %p569 = pneg %p568
      $region50: #{tpu_custom_call.1} parent=5 // pred_check_branch
        %571 = sbr.rel (%p569) target = $region52
      $region51: #{tpu_custom_call.1} parent=5 // pred_region
        %s572 = ssub.s32 %s15, 2
        // Predicated region
        $region53: #{tpu_custom_call.1} parent=51 // pred_check
          %p573 = pneg %p126
        $region54: #{tpu_custom_call.1} parent=51 // pred_check_branch
          %575 = sbr.rel (%p573) target = $region56
        $region55: #{tpu_custom_call.1} parent=51 // pred_region
          %s576 = sand.u32 %s111, 1
          %s577 = scalar_lea.sflag [#allocation6], %s576
          %s578 = sand.u32 %s111, 1
          %s579 = scalar_lea.vmem [#allocation7], %s578
          %581 = dma.done %s577, 16
        $region56: #{tpu_custom_call.1} parent=51 // pred_fallthru
          _
      $region52: #{tpu_custom_call.1} parent=5 // pred_fallthru
        _
    $region6: #{tpu_custom_call.1} parent=1 // loop_footer
      %s19 = sadd.s32 1, %s15
    $region7: #{tpu_custom_call.1} parent=1 // loop_footer_branch
      %14 = sbr.rel target = $region3
    $region8: #{tpu_custom_call.1} parent=1 // loop_exit
      _
    %582 = vsyncpa [#allocation5], 1
    %s583 = scalar_lea.sflag [#allocation5], 1
    %584 = vsyncpa %s583, 1
    %585 = vsyncpa [#allocation6], 1
    %s586 = scalar_lea.sflag [#allocation6], 1
    %587 = vsyncpa %s586, 1

</llo_original>
